<compile_context>
chip_gen: v6e
topology: v6e:2x2x1
jax: 0.10.0
libtpu: 0.0.40
codegen_flags: <defaults>
</compile_context>

<pallas_src>
import functools
import math

import jax
import jax.numpy as jnp
from jax.experimental import pallas as pl
from jax.experimental.pallas import tpu as pltpu


def _mha_kernel(x_ref, wqkv_ref, woh_ref, o_ref, *, batch, seq, num_heads, head_size):
    # x_ref: (B*T, D); wqkv_ref: (D, 3D) bf16; woh_ref: (H, hs, Dp) bf16;
    # o_ref: (B*T, Dp) with Dp a multiple of 128 (lane-dense output slab).
    D = num_heads * head_size
    BT = batch * seq
    scale = 1.0 / math.sqrt(head_size)

    x = x_ref[...].astype(jnp.bfloat16)                                     # (BT, D)

    # Fused QKV projection, batch folded into M: one MXU matmul, f32 accum.
    qkv = jnp.dot(x, wqkv_ref[...], preferred_element_type=jnp.float32)     # (BT, 3D)

    # Fold the attention scale into q (O(T*D) instead of O(T*T) per head),
    # cast MXU operands to bf16 once.
    q = (qkv[:, 0 * D:1 * D] * scale).astype(jnp.bfloat16)                  # (BT, D)
    k = qkv[:, 1 * D:2 * D].astype(jnp.bfloat16)                            # (BT, D)
    v = qkv[:, 2 * D:3 * D].astype(jnp.bfloat16)                            # (BT, D)

    # One-time head split into a head-major (G, T, hs) batch, G = H*B with
    # g = h*B + b.  Built from static (T, hs) slices + one stack: every op is
    # a well-supported Mosaic pattern (no lane-splitting reshapes, no
    # tiled-dim transposes), and it replaces the old per-head matmul loop and
    # masked width-hs scratch stores with one batched dot_general per stage.
    def split_heads(t):                                                     # (BT, D) -> (G, T, hs)
        parts = [t[b * seq:(b + 1) * seq, h * head_size:(h + 1) * head_size]
                 for h in range(num_heads) for b in range(batch)]
        return jnp.stack(parts, axis=0)

    qg = split_heads(q)                                                     # (G, T, hs)
    kg = split_heads(k)
    vg = split_heads(v)

    # Scores (G, T, T): explicit contracting dims so the k "transpose" is
    # folded into the MXU operand fetch (no XLU transpose / relayout).
    s = jax.lax.dot_general(qg, kg, (((2,), (2,)), ((0,), (0,))),
                            preferred_element_type=jnp.float32)             # (G, T, T) f32

    # Softmax in f32 (v5e has no bf16 VPU/EUP), normalization deferred.
    s = s - jnp.max(s, axis=-1, keepdims=True)
    p = jnp.exp(s)                                                          # unnormalized
    denom = jnp.sum(p, axis=-1, keepdims=True)                              # (G, T, 1)

    pv = jax.lax.dot_general(p.astype(jnp.bfloat16), vg,
                             (((2,), (1,)), ((0,), (0,))),
                             preferred_element_type=jnp.float32)            # (G, T, hs) f32
    # Deferred softmax normalization on the small (G, T, hs) output; the
    # approximate reciprocal runs on the EUP slot.
    pv = pv * pl.reciprocal(denom, approx=True)

    # Output projection with the head-concat folded in:
    #   out[m, n] = sum_h  pv[h, m, :] @ WoT[h*hs:(h+1)*hs, n]
    # i.e. a head-batched matmul + leading-dim sum.  No lane re-concatenation
    # of heads, and the only store is one lane-dense (BT, Dp) slab.
    pv_h = pv.reshape(num_heads, BT, head_size).astype(jnp.bfloat16)        # (H, BT, hs)
    proj = jax.lax.dot_general(pv_h, woh_ref[...],
                               (((2,), (1,)), ((0,), (0,))),
                               preferred_element_type=jnp.float32)          # (H, BT, Dp)
    o_ref[...] = jnp.sum(proj, axis=0).astype(o_ref.dtype)                  # (BT, Dp)


def prepare_mha_weights(wq, wk, wv, wo_t, *, num_heads):
    """One-time weight prep (hoisted out of the per-call forward path).

    wq/wk/wv: (D, D) per-head-stacked projection weights; wo_t: (D, D) = Wo^T.
    Returns (w_qkv (D, 3D) bf16, wo_heads (H, hs, Dp) bf16) with Dp a multiple
    of 128 so the kernel's output store is lane-dense.
    """
    D = wq.shape[0]
    hs = D // num_heads
    d_pad = max(128, ((D + 127) // 128) * 128)

    w_qkv = jnp.concatenate([wq, wk, wv], axis=1).astype(jnp.bfloat16)      # (D, 3D)
    wo_pad = jnp.zeros((D, d_pad), jnp.float32).at[:, :D].set(wo_t)         # (D, Dp)
    wo_heads = wo_pad.reshape(num_heads, hs, d_pad).astype(jnp.bfloat16)    # (H, hs, Dp)
    return w_qkv, wo_heads


def multi_headed_attention(x, w_qkv, wo_heads, *, num_heads):
    """x: (B, T, D); w_qkv/wo_heads from prepare_mha_weights."""
    B, T, D = x.shape
    hs = D // num_heads
    d_pad = wo_heads.shape[-1]
    BT = B * T

    x2d = x.reshape(BT, D)   # fold batch into the matmul M dimension

    kernel = functools.partial(_mha_kernel, batch=B, seq=T,
                               num_heads=num_heads, head_size=hs)
    out_pad = pl.pallas_call(
        kernel,
        out_shape=jax.ShapeDtypeStruct((BT, d_pad), x.dtype),
        grid_spec=pltpu.PrefetchScalarGridSpec(
            num_scalar_prefetch=0,
            grid=(1,),   # single block: everything resident at these shapes
            in_specs=[
                pl.BlockSpec((BT, D), lambda i: (0, 0)),
                # NOTE: with a single-step grid there is no pipelining; in a
                # gridded (flash-tiled) version mark the constant weight blocks
                # pipeline_mode=pl.Buffered(1) to avoid double-buffered VMEM.
                pl.BlockSpec((D, 3 * D), lambda i: (0, 0)),
                pl.BlockSpec((num_heads, hs, d_pad), lambda i: (0, 0, 0)),
            ],
            out_specs=pl.BlockSpec((BT, d_pad), lambda i: (0, 0)),
        ),
        compiler_params=pltpu.CompilerParams(dimension_semantics=("arbitrary",)),
    )(x2d, w_qkv, wo_heads)

    # Drop lane padding and restore (B, T, D); both are cheap XLA ops.
    return out_pad[:, :D].reshape(B, T, D)


def _reference(x, wq, wk, wv, wo_t, *, num_heads):
    """Pure-JAX f32 reference mirroring the PyTorch forward."""
    B, T, D = x.shape
    hs = D // num_heads
    q = x @ wq
    k = x @ wk
    v = x @ wv
    outs = []
    for h in range(num_heads):
        qh = q[..., h * hs:(h + 1) * hs]
        kh = k[..., h * hs:(h + 1) * hs]
        vh = v[..., h * hs:(h + 1) * hs]
        s = jnp.einsum("bqd,bkd->bqk", qh, kh) / math.sqrt(hs)
        p = jax.nn.softmax(s, axis=-1)
        outs.append(jnp.einsum("bqk,bkh->bqh", p, vh))
    value = jnp.concatenate(outs, axis=-1)
    return value @ wo_t


if __name__ == "__main__":
    # Small shapes consistent with the module: batch=2, seq=8, emb_dim=32, 4 heads.
    B, T, D, H = 2, 8, 32, 4
    hs = D // H

    key = jax.random.PRNGKey(0)
    kx, kq, kk, kv, ko = jax.random.split(key, 5)

    x = jax.random.normal(kx, (B, T, D), dtype=jnp.float32)

    # Per-head nn.Linear(emb_dim, head_size, bias=False) weights have shape
    # (hs, D); forward computes x @ W.T, so build (D, hs) blocks and stack
    # them along columns to emulate the head loop + concatenate(dim=2).
    def stacked_proj(k):
        w = jax.random.normal(k, (H, hs, D), dtype=jnp.float32) * 0.08
        return jnp.concatenate([w[h].T for h in range(H)], axis=-1)          # (D, H*hs)

    wq = stacked_proj(kq)
    wk = stacked_proj(kk)
    wv = stacked_proj(kv)

    wo = jax.random.normal(ko, (D, D), dtype=jnp.float32) * 0.08             # nn.Linear(D, D)
    wo_t = wo.T                                                              # kernel uses value @ Wo^T

    # One-time weight prep (hoisted out of the forward path).
    w_qkv, wo_heads = prepare_mha_weights(wq, wk, wv, wo_t, num_heads=H)

    out = multi_headed_attention(x, w_qkv, wo_heads, num_heads=H)
    out = jax.block_until_ready(out)

    ref = _reference(x, wq, wk, wv, wo_t, num_heads=H)
    assert out.shape == (B, T, D)
    # Tolerance loosened vs. pure-f32: bf16 MXU operands + approx EUP
    # reciprocal (accumulation stays f32).
    assert jnp.allclose(out, ref, atol=2e-2, rtol=2e-2), "Pallas output mismatch vs reference"

    print("KERNEL_OK")
</pallas_src>

<mosaic_0001>
module attributes {stable_mosaic.version = 11 : i64} {
  func.func @_mha_kernel(%arg0: i32, %arg1: memref<16x32xf32, #tpu.memory_space<vmem>>, %arg2: memref<32x96xbf16, #tpu.memory_space<vmem>>, %arg3: memref<4x8x128xbf16, #tpu.memory_space<vmem>>, %arg4: memref<16x128xf32, #tpu.memory_space<vmem>>) attributes {dimension_semantics = [#tpu.dimension_semantics<arbitrary>], iteration_bounds = array<i64: 1>, scalar_prefetch = 0 : i64, scratch_operands = 0 : i64, tpu.core_type = #tpu.core_type<tc>, window_params = [{pipeline_mode = #tpu.pipeline_mode<synchronous>, transform_indices = @transform_0, window_bounds = array<i64: 16, 32>}, {pipeline_mode = #tpu.pipeline_mode<synchronous>, transform_indices = @transform_1, window_bounds = array<i64: 32, 96>}, {pipeline_mode = #tpu.pipeline_mode<synchronous>, transform_indices = @transform_2, window_bounds = array<i64: 4, 8, 128>}, {pipeline_mode = #tpu.pipeline_mode<synchronous>, transform_indices = @transform_3, window_bounds = array<i64: 16, 128>}]} {
    %c0 = arith.constant 0 : index
    %c0_0 = arith.constant 0 : index
    %0 = vector.load %arg1[%c0, %c0_0] : memref<16x32xf32, #tpu.memory_space<vmem>>, vector<16x32xf32>
    %1 = arith.truncf %0 : vector<16x32xf32> to vector<16x32xbf16>
    %c0_1 = arith.constant 0 : index
    %c0_2 = arith.constant 0 : index
    %2 = vector.load %arg2[%c0_1, %c0_2] : memref<32x96xbf16, #tpu.memory_space<vmem>>, vector<32x96xbf16>
    %cst = arith.constant dense<0.000000e+00> : vector<16x96xf32>
    %3 = tpu.matmul %1, %2, %cst {dimension_numbers = #tpu.dot_dimension_numbers<[1], [0], [0], [1], [0, 0, 1, 1], [], []>} : vector<16x32xbf16>, vector<32x96xbf16>, vector<16x96xf32> -> vector<16x96xf32>
    %4 = vector.extract_strided_slice %3 {offsets = [0, 0], sizes = [16, 32], strides = [1, 1]} : vector<16x96xf32> to vector<16x32xf32>
    %cst_3 = arith.constant 0.353553385 : f32
    %5 = vector.broadcast %cst_3 : f32 to vector<16x32xf32>
    %6 = arith.mulf %4, %5 : vector<16x32xf32>
    %7 = arith.truncf %6 : vector<16x32xf32> to vector<16x32xbf16>
    %8 = vector.extract_strided_slice %3 {offsets = [0, 32], sizes = [16, 32], strides = [1, 1]} : vector<16x96xf32> to vector<16x32xf32>
    %9 = arith.truncf %8 : vector<16x32xf32> to vector<16x32xbf16>
    %10 = vector.extract_strided_slice %3 {offsets = [0, 64], sizes = [16, 32], strides = [1, 1]} : vector<16x96xf32> to vector<16x32xf32>
    %11 = arith.truncf %10 : vector<16x32xf32> to vector<16x32xbf16>
    %12 = vector.extract_strided_slice %7 {offsets = [0, 0], sizes = [8, 8], strides = [1, 1]} : vector<16x32xbf16> to vector<8x8xbf16>
    %13 = vector.extract_strided_slice %7 {offsets = [8, 0], sizes = [8, 8], strides = [1, 1]} : vector<16x32xbf16> to vector<8x8xbf16>
    %14 = vector.extract_strided_slice %7 {offsets = [0, 8], sizes = [8, 8], strides = [1, 1]} : vector<16x32xbf16> to vector<8x8xbf16>
    %15 = vector.extract_strided_slice %7 {offsets = [8, 8], sizes = [8, 8], strides = [1, 1]} : vector<16x32xbf16> to vector<8x8xbf16>
    %16 = vector.extract_strided_slice %7 {offsets = [0, 16], sizes = [8, 8], strides = [1, 1]} : vector<16x32xbf16> to vector<8x8xbf16>
    %17 = vector.extract_strided_slice %7 {offsets = [8, 16], sizes = [8, 8], strides = [1, 1]} : vector<16x32xbf16> to vector<8x8xbf16>
    %18 = vector.extract_strided_slice %7 {offsets = [0, 24], sizes = [8, 8], strides = [1, 1]} : vector<16x32xbf16> to vector<8x8xbf16>
    %19 = vector.extract_strided_slice %7 {offsets = [8, 24], sizes = [8, 8], strides = [1, 1]} : vector<16x32xbf16> to vector<8x8xbf16>
    %20 = vector.shape_cast %12 : vector<8x8xbf16> to vector<1x8x8xbf16>
    %21 = vector.shape_cast %13 : vector<8x8xbf16> to vector<1x8x8xbf16>
    %22 = vector.shape_cast %14 : vector<8x8xbf16> to vector<1x8x8xbf16>
    %23 = vector.shape_cast %15 : vector<8x8xbf16> to vector<1x8x8xbf16>
    %24 = vector.shape_cast %16 : vector<8x8xbf16> to vector<1x8x8xbf16>
    %25 = vector.shape_cast %17 : vector<8x8xbf16> to vector<1x8x8xbf16>
    %26 = vector.shape_cast %18 : vector<8x8xbf16> to vector<1x8x8xbf16>
    %27 = vector.shape_cast %19 : vector<8x8xbf16> to vector<1x8x8xbf16>
    %28 = tpu.concatenate %20, %21, %22, %23, %24, %25, %26, %27 in 0 : vector<1x8x8xbf16>, vector<1x8x8xbf16>, vector<1x8x8xbf16>, vector<1x8x8xbf16>, vector<1x8x8xbf16>, vector<1x8x8xbf16>, vector<1x8x8xbf16>, vector<1x8x8xbf16> -> vector<8x8x8xbf16>
    %29 = vector.extract_strided_slice %9 {offsets = [0, 0], sizes = [8, 8], strides = [1, 1]} : vector<16x32xbf16> to vector<8x8xbf16>
    %30 = vector.extract_strided_slice %9 {offsets = [8, 0], sizes = [8, 8], strides = [1, 1]} : vector<16x32xbf16> to vector<8x8xbf16>
    %31 = vector.extract_strided_slice %9 {offsets = [0, 8], sizes = [8, 8], strides = [1, 1]} : vector<16x32xbf16> to vector<8x8xbf16>
    %32 = vector.extract_strided_slice %9 {offsets = [8, 8], sizes = [8, 8], strides = [1, 1]} : vector<16x32xbf16> to vector<8x8xbf16>
    %33 = vector.extract_strided_slice %9 {offsets = [0, 16], sizes = [8, 8], strides = [1, 1]} : vector<16x32xbf16> to vector<8x8xbf16>
    %34 = vector.extract_strided_slice %9 {offsets = [8, 16], sizes = [8, 8], strides = [1, 1]} : vector<16x32xbf16> to vector<8x8xbf16>
    %35 = vector.extract_strided_slice %9 {offsets = [0, 24], sizes = [8, 8], strides = [1, 1]} : vector<16x32xbf16> to vector<8x8xbf16>
    %36 = vector.extract_strided_slice %9 {offsets = [8, 24], sizes = [8, 8], strides = [1, 1]} : vector<16x32xbf16> to vector<8x8xbf16>
    %37 = vector.shape_cast %29 : vector<8x8xbf16> to vector<1x8x8xbf16>
    %38 = vector.shape_cast %30 : vector<8x8xbf16> to vector<1x8x8xbf16>
    %39 = vector.shape_cast %31 : vector<8x8xbf16> to vector<1x8x8xbf16>
    %40 = vector.shape_cast %32 : vector<8x8xbf16> to vector<1x8x8xbf16>
    %41 = vector.shape_cast %33 : vector<8x8xbf16> to vector<1x8x8xbf16>
    %42 = vector.shape_cast %34 : vector<8x8xbf16> to vector<1x8x8xbf16>
    %43 = vector.shape_cast %35 : vector<8x8xbf16> to vector<1x8x8xbf16>
    %44 = vector.shape_cast %36 : vector<8x8xbf16> to vector<1x8x8xbf16>
    %45 = tpu.concatenate %37, %38, %39, %40, %41, %42, %43, %44 in 0 : vector<1x8x8xbf16>, vector<1x8x8xbf16>, vector<1x8x8xbf16>, vector<1x8x8xbf16>, vector<1x8x8xbf16>, vector<1x8x8xbf16>, vector<1x8x8xbf16>, vector<1x8x8xbf16> -> vector<8x8x8xbf16>
    %46 = vector.extract_strided_slice %11 {offsets = [0, 0], sizes = [8, 8], strides = [1, 1]} : vector<16x32xbf16> to vector<8x8xbf16>
    %47 = vector.extract_strided_slice %11 {offsets = [8, 0], sizes = [8, 8], strides = [1, 1]} : vector<16x32xbf16> to vector<8x8xbf16>
    %48 = vector.extract_strided_slice %11 {offsets = [0, 8], sizes = [8, 8], strides = [1, 1]} : vector<16x32xbf16> to vector<8x8xbf16>
    %49 = vector.extract_strided_slice %11 {offsets = [8, 8], sizes = [8, 8], strides = [1, 1]} : vector<16x32xbf16> to vector<8x8xbf16>
    %50 = vector.extract_strided_slice %11 {offsets = [0, 16], sizes = [8, 8], strides = [1, 1]} : vector<16x32xbf16> to vector<8x8xbf16>
    %51 = vector.extract_strided_slice %11 {offsets = [8, 16], sizes = [8, 8], strides = [1, 1]} : vector<16x32xbf16> to vector<8x8xbf16>
    %52 = vector.extract_strided_slice %11 {offsets = [0, 24], sizes = [8, 8], strides = [1, 1]} : vector<16x32xbf16> to vector<8x8xbf16>
    %53 = vector.extract_strided_slice %11 {offsets = [8, 24], sizes = [8, 8], strides = [1, 1]} : vector<16x32xbf16> to vector<8x8xbf16>
    %54 = vector.shape_cast %46 : vector<8x8xbf16> to vector<1x8x8xbf16>
    %55 = vector.shape_cast %47 : vector<8x8xbf16> to vector<1x8x8xbf16>
    %56 = vector.shape_cast %48 : vector<8x8xbf16> to vector<1x8x8xbf16>
    %57 = vector.shape_cast %49 : vector<8x8xbf16> to vector<1x8x8xbf16>
    %58 = vector.shape_cast %50 : vector<8x8xbf16> to vector<1x8x8xbf16>
    %59 = vector.shape_cast %51 : vector<8x8xbf16> to vector<1x8x8xbf16>
    %60 = vector.shape_cast %52 : vector<8x8xbf16> to vector<1x8x8xbf16>
    %61 = vector.shape_cast %53 : vector<8x8xbf16> to vector<1x8x8xbf16>
    %62 = tpu.concatenate %54, %55, %56, %57, %58, %59, %60, %61 in 0 : vector<1x8x8xbf16>, vector<1x8x8xbf16>, vector<1x8x8xbf16>, vector<1x8x8xbf16>, vector<1x8x8xbf16>, vector<1x8x8xbf16>, vector<1x8x8xbf16>, vector<1x8x8xbf16> -> vector<8x8x8xbf16>
    %cst_4 = arith.constant dense<0.000000e+00> : vector<8x8x8xf32>
    %63 = tpu.matmul %28, %45, %cst_4 {dimension_numbers = #tpu.dot_dimension_numbers<[2], [2], [1], [1], [0, 0, 0, 1, 1, 1], [0], [0]>} : vector<8x8x8xbf16>, vector<8x8x8xbf16>, vector<8x8x8xf32> -> vector<8x8x8xf32>
    %cst_5 = arith.constant dense<0xFF800000> : vector<8x8xf32>
    %64 = vector.multi_reduction <maximumf>, %63, %cst_5 [2] : vector<8x8x8xf32> to vector<8x8xf32>
    %65 = vector.shape_cast %64 : vector<8x8xf32> to vector<8x8x1xf32>
    %66 = vector.broadcast %65 : vector<8x8x1xf32> to vector<8x8x8xf32>
    %67 = arith.subf %63, %66 : vector<8x8x8xf32>
    %68 = math.exp %67 : vector<8x8x8xf32>
    %cst_6 = arith.constant dense<0.000000e+00> : vector<8x8xf32>
    %69 = vector.multi_reduction <add>, %68, %cst_6 [2] : vector<8x8x8xf32> to vector<8x8xf32>
    %70 = vector.shape_cast %69 : vector<8x8xf32> to vector<8x8x1xf32>
    %71 = arith.truncf %68 : vector<8x8x8xf32> to vector<8x8x8xbf16>
    %cst_7 = arith.constant dense<0.000000e+00> : vector<8x8x8xf32>
    %72 = tpu.matmul %71, %62, %cst_7 {dimension_numbers = #tpu.dot_dimension_numbers<[2], [1], [1], [2], [0, 0, 0, 1, 1, 2], [0], [0]>} : vector<8x8x8xbf16>, vector<8x8x8xbf16>, vector<8x8x8xf32> -> vector<8x8x8xf32>
    %73 = tpu.reciprocal %70 {approx = true} : vector<8x8x1xf32> -> vector<8x8x1xf32>
    %74 = vector.broadcast %73 : vector<8x8x1xf32> to vector<8x8x8xf32>
    %75 = arith.mulf %72, %74 : vector<8x8x8xf32>
    %76 = vector.shape_cast %75 : vector<8x8x8xf32> to vector<4x16x8xf32>
    %77 = arith.truncf %76 : vector<4x16x8xf32> to vector<4x16x8xbf16>
    %c0_8 = arith.constant 0 : index
    %c0_9 = arith.constant 0 : index
    %c0_10 = arith.constant 0 : index
    %78 = vector.load %arg3[%c0_8, %c0_9, %c0_10] : memref<4x8x128xbf16, #tpu.memory_space<vmem>>, vector<4x8x128xbf16>
    %cst_11 = arith.constant dense<0.000000e+00> : vector<4x16x128xf32>
    %79 = tpu.matmul %77, %78, %cst_11 {dimension_numbers = #tpu.dot_dimension_numbers<[2], [1], [1], [2], [0, 0, 0, 1, 1, 2], [0], [0]>} : vector<4x16x8xbf16>, vector<4x8x128xbf16>, vector<4x16x128xf32> -> vector<4x16x128xf32>
    %cst_12 = arith.constant dense<0.000000e+00> : vector<16x128xf32>
    %80 = vector.multi_reduction <add>, %79, %cst_12 [0] : vector<4x16x128xf32> to vector<16x128xf32>
    %c0_13 = arith.constant 0 : index
    %c0_14 = arith.constant 0 : index
    %81 = vector.load %arg4[%c0_13, %c0_14] : memref<16x128xf32, #tpu.memory_space<vmem>>, vector<16x128xf32>
    tpu.vector_store %arg4[%c0_13, %c0_14], %80 {strides = array<i32>} : memref<16x128xf32, #tpu.memory_space<vmem>>, vector<16x128xf32>,
    return
  }
  func.func @transform_0(%arg0: i32) -> (i32, i32) {
    %c0_i32 = arith.constant 0 : i32
    %c0_i32_0 = arith.constant 0 : i32
    %c0_i32_1 = arith.constant 0 : i32
    return %c0_i32, %c0_i32_0 : i32, i32
  }
  func.func @transform_1(%arg0: i32) -> (i32, i32) {
    %c0_i32 = arith.constant 0 : i32
    %c0_i32_0 = arith.constant 0 : i32
    %c0_i32_1 = arith.constant 0 : i32
    return %c0_i32, %c0_i32_0 : i32, i32
  }
  func.func @transform_2(%arg0: i32) -> (i32, i32, i32) {
    %c0_i32 = arith.constant 0 : i32
    %c0_i32_0 = arith.constant 0 : i32
    %c0_i32_1 = arith.constant 0 : i32
    %c0_i32_2 = arith.constant 0 : i32
    return %c0_i32, %c0_i32_0, %c0_i32_1 : i32, i32, i32
  }
  func.func @transform_3(%arg0: i32) -> (i32, i32) {
    %c0_i32 = arith.constant 0 : i32
    %c0_i32_0 = arith.constant 0 : i32
    %c0_i32_1 = arith.constant 0 : i32
    return %c0_i32, %c0_i32_0 : i32, i32
  }
}

</mosaic_0001>

<llo_original>
// kernel: tpu_custom_call.1
$region0: #{tpu_custom_call.1}
  #allocation0 [shape = 'u32[]', space=smem, size = 0x4, offset = 0x4, fixed_abs, tag = 'smem constant byte address 0x4 - core index']
  #allocation1 [shape = 'u32[144,128]{1,0:T(1,128)}', space=vmem, size = 0x12000, scoped, tag = 'internal scratch']
  %s0 = inlined_call_operand.hbm [shape: f32[16,32], index: 0, kind: input, shape index: {}]
  %s1 = inlined_call_operand.hbm [shape: bf16[32,96], index: 1, kind: input, shape index: {}]
  %s2 = inlined_call_operand.hbm [shape: bf16[4,8,128], index: 2, kind: input, shape index: {}]
  %s3 = inlined_call_operand.hbm [shape: f32[16,128], index: 3, kind: output, shape index: {}]
  %s4 = sld [smem:[#allocation0]]
  $region34: #{tpu_custom_call.1} parent=0
    _
  %s6 = ssub.s32 1, %s4
  %s7 = scalar_select 0, %s6, %s4
  $region1: #{tpu_custom_call.1} parent=0
    #allocation2 [shape = 'u8[8192]{0}', space=vmem, size = 0x2000, scoped, tag = 'input window, operand 0, single buffered']
    #allocation3 [shape = 's32[1]{0}', space=sflag, size = 0x4, scoped, tag = 'scoped memory for tpu_custom_call.1']
    #allocation4 [shape = 's32[1]{0}', space=sflag, size = 0x4, scoped, tag = 'scoped memory for tpu_custom_call.1']
    #allocation5 [shape = 'u8[8192]{0}', space=vmem, size = 0x2000, scoped, tag = 'input window, operand 1, single buffered']
    #allocation6 [shape = 's32[1]{0}', space=sflag, size = 0x4, scoped, tag = 'scoped memory for tpu_custom_call.1']
    #allocation7 [shape = 'u8[8192]{0}', space=vmem, size = 0x2000, scoped, tag = 'input window, operand 2, single buffered']
    #allocation8 [shape = 'u8[8192]{0}', space=vmem, size = 0x2000, scoped, tag = 'output window, operand 0, single buffered']
    %8 = vsyncpa [#allocation3], 0
    %9 = vsyncpa [#allocation6], 0
    %10 = vsyncpa [#allocation4], 0
    // Predicated region
    $region2: #{tpu_custom_call.1} parent=1 // pred_check
      _
    $region3: #{tpu_custom_call.1} parent=1 // pred_check_branch
      %12 = sbr.rel (0) target = $region5
    $region4: #{tpu_custom_call.1} parent=1 // pred_region
      %s14 = ssub.s32 256, 256
      %15 = vsyncadd [#allocation3], %s14
      %s16 = sshll.u32 [#allocation2], 4
      %s17 = int_to_ptr.vmem [resolvable:$true] %s16
      %22 = dma.hbm_to_vmem [thread:$0]  %s0, 256, %s17, [#allocation3], 128, 128, 8
    $region5: #{tpu_custom_call.1} parent=1 // pred_fallthru
      _
    // Predicated region
    $region6: #{tpu_custom_call.1} parent=1 // pred_check
      _
    $region7: #{tpu_custom_call.1} parent=1 // pred_check_branch
      %24 = sbr.rel (0) target = $region9
    $region8: #{tpu_custom_call.1} parent=1 // pred_region
      %s26 = ssub.s32 256, 256
      %27 = vsyncadd [#allocation6], %s26
      %s28 = sshll.u32 [#allocation5], 4
      %s29 = int_to_ptr.vmem [resolvable:$true] %s28
      %34 = dma.hbm_to_vmem [thread:$0]  %s1, 256, %s29, [#allocation6], 64, 64, 4
    $region9: #{tpu_custom_call.1} parent=1 // pred_fallthru
      _
    // Predicated region
    $region10: #{tpu_custom_call.1} parent=1 // pred_check
      _
    $region11: #{tpu_custom_call.1} parent=1 // pred_check_branch
      %36 = sbr.rel (0) target = $region13
    $region12: #{tpu_custom_call.1} parent=1 // pred_region
      %s38 = ssub.s32 256, 256
      %39 = vsyncadd [#allocation6], %s38
      %s40 = sshll.u32 [#allocation7], 4
      %s41 = int_to_ptr.vmem [resolvable:$true] %s40
      %46 = dma.hbm_to_vmem [thread:$0]  %s2, 256, %s41, [#allocation6], 64, 64, 4
    $region13: #{tpu_custom_call.1} parent=1 // pred_fallthru
      _
    // Predicated region
    $region14: #{tpu_custom_call.1} parent=1 // pred_check
      _
    $region15: #{tpu_custom_call.1} parent=1 // pred_check_branch
      %48 = sbr.rel (0) target = $region17
    $region16: #{tpu_custom_call.1} parent=1 // pred_region
      %49 = dma.done [#allocation3], 256
    $region17: #{tpu_custom_call.1} parent=1 // pred_fallthru
      _
    // Predicated region
    $region18: #{tpu_custom_call.1} parent=1 // pred_check
      _
    $region19: #{tpu_custom_call.1} parent=1 // pred_check_branch
      %51 = sbr.rel (0) target = $region21
    $region20: #{tpu_custom_call.1} parent=1 // pred_region
      %52 = dma.done [#allocation6], 256
    $region21: #{tpu_custom_call.1} parent=1 // pred_fallthru
      _
    // Predicated region
    $region22: #{tpu_custom_call.1} parent=1 // pred_check
      _
    $region23: #{tpu_custom_call.1} parent=1 // pred_check_branch
      %54 = sbr.rel (0) target = $region25
    $region24: #{tpu_custom_call.1} parent=1 // pred_region
      %55 = dma.done [#allocation6], 256
    $region25: #{tpu_custom_call.1} parent=1 // pred_fallthru
      _
    %v57 = vld [vmem:[#allocation2] sm:$0xff]
    %v58 = vld [vmem:[#allocation2 + $0x8] sm:$0xff]
    %v59 = vpack.c.bf16 %v58, %v57
    %v60 = vld [vmem:[#allocation5] sm:$0xf]
    %v61 = vld [vmem:[#allocation5 + $0x4] sm:$0xf]
    %v62 = vld [vmem:[#allocation5 + $0x8] sm:$0xf]
    %v63 = vld [vmem:[#allocation5 + $0xc] sm:$0xf]
    %v68 = vunpack.c.l.b16 %v60
    %v69 = vunpack.c.l.b16 %v61
    %v70 = vunpack.c.l.b16 %v62
    %v71 = vunpack.c.l.b16 %v63
    %v72 = vpack.c.b16 %v69, %v68
    %v73 = vpack.c.b16 %v71, %v70
    %vm76 = vcmask 261120
    %v78 = vsel %vm76, %v59, 0
    %80 = vmatprep.subr.bf16.mxu0 0
    %81 = vmatpush1.bf16.msra.mxu0 0
    %82 = vmatprep.subr.bf16.mxu0 0
    %83 = vmatpush1.bf16.msra.mxu0 0
    %84 = vmatprep.subr.bf16.mxu0 0
    %85 = vmatpush1.bf16.msra.mxu0 0
    %86 = vmatprep.subr.bf16.mxu0 0
    %87 = vmatpush1.bf16.msra.mxu0 0
    %88 = vmatprep.subr.bf16.mxu0 0
    %89 = vmatpush1.bf16.msra.mxu0 0
    %90 = vmatprep.subr.bf16.mxu0 0
    %91 = vmatpush1.bf16.msra.mxu0 0
    %92 = vmatprep.subr.bf16.mxu0 0
    %93 = vmatpush1.bf16.msra.mxu0 %v73
    %94 = vmatprep.subr.bf16.mxu0 0
    %95 = vmatpush1.bf16.msra.mxu0 %v72
    %96 = vmatprep.subr.bf16.mxu0 0
    %97 = vmatpush2.bf16.msra.mxu0 0
    %98 = vmatprep.subr.bf16.mxu0 0
    %99 = vmatpush2.bf16.msra.mxu0 0
    %100 = vmatprep.subr.bf16.mxu0 0
    %101 = vmatpush2.bf16.msra.mxu0 0
    %102 = vmatprep.subr.bf16.mxu0 0
    %103 = vmatpush2.bf16.msra.mxu0 0
    %104 = vmatprep.subr.bf16.mxu0 0
    %105 = vmatpush2.bf16.msra.mxu0 0
    %106 = vmatprep.subr.bf16.mxu0 0
    %107 = vmatpush2.bf16.msra.mxu0 0
    %108 = vmatprep.subr.bf16.mxu0 0
    %109 = vmatpush2.bf16.msra.mxu0 0
    %110 = vmatprep.subr.bf16.mxu0 0
    %111 = vmatpush2.bf16.msra.mxu0 0
    %112 = vmatprep.mubr.bf16.mxu0 0
    %113 = vmatmul.mubr.bf16.gmra.mxu0 %v78
    %v114 = vpop.f32.mrf.mxu0
    %v115 = vadd.f32 0.0, %v114
    %v116 = vpop.f32.mrf.mxu0
    %v117 = vpop.f32.mrf.mxu0
    %v118 = vadd.f32 0.0, %v117
    %v119 = vpop.f32.mrf.mxu0
    %120 = vdwg.mxu0
    %v121 = vmul.f32 %v115, 0.35355338
    %v122 = vmul.f32 %v118, 0.35355338
    %v123 = vpack.c.bf16 %v122, %v121
    %v124 = vpack.c.bf16 %v118, %v115
    %v126 = vrot.slane %v123, 4
    %127 = vrot.lane.b32.xlu0 %v123, 120
    %v128 = vpop.permute.xlu0 %127
    %129 = vrot.lane.b32.xlu0 %v126, 120
    %v130 = vpop.permute.xlu0 %129
    %131 = vrot.lane.b32.xlu0 %v123, 112
    %v132 = vpop.permute.xlu0 %131
    %133 = vrot.lane.b32.xlu0 %v126, 112
    %v134 = vpop.permute.xlu0 %133
    %135 = vrot.lane.b32.xlu0 %v123, 104
    %v136 = vpop.permute.xlu0 %135
    %137 = vrot.lane.b32.xlu0 %v126, 104
    %v138 = vpop.permute.xlu0 %137
    %v140 = vrot.slane %v124, 4
    %141 = vrot.lane.b32.xlu0 %v124, 120
    %v142 = vpop.permute.xlu0 %141
    %143 = vrot.lane.b32.xlu0 %v140, 120
    %v144 = vpop.permute.xlu0 %143
    %145 = vrot.lane.b32.xlu0 %v124, 112
    %v146 = vpop.permute.xlu0 %145
    %147 = vrot.lane.b32.xlu0 %v140, 112
    %v148 = vpop.permute.xlu0 %147
    %149 = vrot.lane.b32.xlu0 %v124, 104
    %v150 = vpop.permute.xlu0 %149
    %151 = vrot.lane.b32.xlu0 %v140, 104
    %v152 = vpop.permute.xlu0 %151
    %153 = vrot.lane.b32.xlu0 %v124, 96
    %v154 = vpop.permute.xlu0 %153
    %vm155 = vcmask 64512
    %v157 = vsel %vm155, %v123, 0
    %v160 = vsel %vm155, %v154, 0
    %162 = vmatprep.subr.bf16.mxu0 0
    %163 = vmatpush1.bf16.xpose.msra.mxu0 0
    %164 = vmatprep.subr.bf16.mxu0 0
    %165 = vmatpush1.bf16.xpose.msra.mxu0 0
    %166 = vmatprep.subr.bf16.mxu0 0
    %167 = vmatpush1.bf16.xpose.msra.mxu0 0
    %168 = vmatprep.subr.bf16.mxu0 0
    %169 = vmatpush1.bf16.xpose.msra.mxu0 0
    %170 = vmatprep.subr.bf16.mxu0 0
    %171 = vmatpush1.bf16.xpose.msra.mxu0 0
    %172 = vmatprep.subr.bf16.mxu0 0
    %173 = vmatpush1.bf16.xpose.msra.mxu0 0
    %174 = vmatprep.subr.bf16.mxu0 0
    %175 = vmatpush1.bf16.xpose.msra.mxu0 0
    %176 = vmatprep.subr.bf16.mxu0 0
    %177 = vmatpush1.bf16.xpose.msra.mxu0 %v160
    %178 = vmatprep.subr.bf16.mxu0 0
    %179 = vmatpush2.bf16.xpose.msra.mxu0 0
    %180 = vmatprep.subr.bf16.mxu0 0
    %181 = vmatpush2.bf16.xpose.msra.mxu0 0
    %182 = vmatprep.subr.bf16.mxu0 0
    %183 = vmatpush2.bf16.xpose.msra.mxu0 0
    %184 = vmatprep.subr.bf16.mxu0 0
    %185 = vmatpush2.bf16.xpose.msra.mxu0 0
    %186 = vmatprep.subr.bf16.mxu0 0
    %187 = vmatpush2.bf16.xpose.msra.mxu0 0
    %188 = vmatprep.subr.bf16.mxu0 0
    %189 = vmatpush2.bf16.xpose.msra.mxu0 0
    %190 = vmatprep.subr.bf16.mxu0 0
    %191 = vmatpush2.bf16.xpose.msra.mxu0 0
    %192 = vmatprep.subr.bf16.mxu0 0
    %193 = vmatpush2.bf16.xpose.msra.mxu0 0
    %194 = vmatprep.mubr.bf16.mxu0 0
    %195 = vmatmul.mubr.bf16.gmra.mxu0 %v157
    %v196 = vpop.f32.mrf.mxu0
    %v197 = vadd.f32 0.0, %v196
    %v198 = vpop.f32.mrf.mxu0
    %v199 = vpop.f32.mrf.mxu0
    %v200 = vpop.f32.mrf.mxu0
    %201 = vdwg.mxu0
    %202 = vrot.lane.b32.xlu0 %v140, 96
    %v203 = vpop.permute.xlu0 %202
    %v205 = vsel %vm155, %v126, 0
    %v208 = vsel %vm155, %v203, 0
    %210 = vmatprep.subr.bf16.mxu0 0
    %211 = vmatpush1.bf16.xpose.msra.mxu0 0
    %212 = vmatprep.subr.bf16.mxu0 0
    %213 = vmatpush1.bf16.xpose.msra.mxu0 0
    %214 = vmatprep.subr.bf16.mxu0 0
    %215 = vmatpush1.bf16.xpose.msra.mxu0 0
    %216 = vmatprep.subr.bf16.mxu0 0
    %217 = vmatpush1.bf16.xpose.msra.mxu0 0
    %218 = vmatprep.subr.bf16.mxu0 0
    %219 = vmatpush1.bf16.xpose.msra.mxu0 0
    %220 = vmatprep.subr.bf16.mxu0 0
    %221 = vmatpush1.bf16.xpose.msra.mxu0 0
    %222 = vmatprep.subr.bf16.mxu0 0
    %223 = vmatpush1.bf16.xpose.msra.mxu0 0
    %224 = vmatprep.subr.bf16.mxu0 0
    %225 = vmatpush1.bf16.xpose.msra.mxu0 %v208
    %226 = vmatprep.subr.bf16.mxu0 0
    %227 = vmatpush2.bf16.xpose.msra.mxu0 0
    %228 = vmatprep.subr.bf16.mxu0 0
    %229 = vmatpush2.bf16.xpose.msra.mxu0 0
    %230 = vmatprep.subr.bf16.mxu0 0
    %231 = vmatpush2.bf16.xpose.msra.mxu0 0
    %232 = vmatprep.subr.bf16.mxu0 0
    %233 = vmatpush2.bf16.xpose.msra.mxu0 0
    %234 = vmatprep.subr.bf16.mxu0 0
    %235 = vmatpush2.bf16.xpose.msra.mxu0 0
    %236 = vmatprep.subr.bf16.mxu0 0
    %237 = vmatpush2.bf16.xpose.msra.mxu0 0
    %238 = vmatprep.subr.bf16.mxu0 0
    %239 = vmatpush2.bf16.xpose.msra.mxu0 0
    %240 = vmatprep.subr.bf16.mxu0 0
    %241 = vmatpush2.bf16.xpose.msra.mxu0 0
    %242 = vmatprep.mubr.bf16.mxu0 0
    %243 = vmatmul.mubr.bf16.gmra.mxu0 %v205
    %v244 = vpop.f32.mrf.mxu0
    %v245 = vadd.f32 0.0, %v244
    %v246 = vpop.f32.mrf.mxu0
    %v247 = vpop.f32.mrf.mxu0
    %v248 = vpop.f32.mrf.mxu0
    %249 = vdwg.mxu0
    %250 = vrot.lane.b32.xlu0 %v142, 96
    %v251 = vpop.permute.xlu0 %250
    %v253 = vsel %vm155, %v128, 0
    %v256 = vsel %vm155, %v251, 0
    %258 = vmatprep.subr.bf16.mxu0 0
    %259 = vmatpush1.bf16.xpose.msra.mxu0 0
    %260 = vmatprep.subr.bf16.mxu0 0
    %261 = vmatpush1.bf16.xpose.msra.mxu0 0
    %262 = vmatprep.subr.bf16.mxu0 0
    %263 = vmatpush1.bf16.xpose.msra.mxu0 0
    %264 = vmatprep.subr.bf16.mxu0 0
    %265 = vmatpush1.bf16.xpose.msra.mxu0 0
    %266 = vmatprep.subr.bf16.mxu0 0
    %267 = vmatpush1.bf16.xpose.msra.mxu0 0
    %268 = vmatprep.subr.bf16.mxu0 0
    %269 = vmatpush1.bf16.xpose.msra.mxu0 0
    %270 = vmatprep.subr.bf16.mxu0 0
    %271 = vmatpush1.bf16.xpose.msra.mxu0 0
    %272 = vmatprep.subr.bf16.mxu0 0
    %273 = vmatpush1.bf16.xpose.msra.mxu0 %v256
    %274 = vmatprep.subr.bf16.mxu0 0
    %275 = vmatpush2.bf16.xpose.msra.mxu0 0
    %276 = vmatprep.subr.bf16.mxu0 0
    %277 = vmatpush2.bf16.xpose.msra.mxu0 0
    %278 = vmatprep.subr.bf16.mxu0 0
    %279 = vmatpush2.bf16.xpose.msra.mxu0 0
    %280 = vmatprep.subr.bf16.mxu0 0
    %281 = vmatpush2.bf16.xpose.msra.mxu0 0
    %282 = vmatprep.subr.bf16.mxu0 0
    %283 = vmatpush2.bf16.xpose.msra.mxu0 0
    %284 = vmatprep.subr.bf16.mxu0 0
    %285 = vmatpush2.bf16.xpose.msra.mxu0 0
    %286 = vmatprep.subr.bf16.mxu0 0
    %287 = vmatpush2.bf16.xpose.msra.mxu0 0
    %288 = vmatprep.subr.bf16.mxu0 0
    %289 = vmatpush2.bf16.xpose.msra.mxu0 0
    %290 = vmatprep.mubr.bf16.mxu0 0
    %291 = vmatmul.mubr.bf16.gmra.mxu0 %v253
    %v292 = vpop.f32.mrf.mxu0
    %v293 = vadd.f32 0.0, %v292
    %v294 = vpop.f32.mrf.mxu0
    %v295 = vpop.f32.mrf.mxu0
    %v296 = vpop.f32.mrf.mxu0
    %297 = vdwg.mxu0
    %298 = vrot.lane.b32.xlu0 %v144, 96
    %v299 = vpop.permute.xlu0 %298
    %v301 = vsel %vm155, %v130, 0
    %v304 = vsel %vm155, %v299, 0
    %306 = vmatprep.subr.bf16.mxu0 0
    %307 = vmatpush1.bf16.xpose.msra.mxu0 0
    %308 = vmatprep.subr.bf16.mxu0 0
    %309 = vmatpush1.bf16.xpose.msra.mxu0 0
    %310 = vmatprep.subr.bf16.mxu0 0
    %311 = vmatpush1.bf16.xpose.msra.mxu0 0
    %312 = vmatprep.subr.bf16.mxu0 0
    %313 = vmatpush1.bf16.xpose.msra.mxu0 0
    %314 = vmatprep.subr.bf16.mxu0 0
    %315 = vmatpush1.bf16.xpose.msra.mxu0 0
    %316 = vmatprep.subr.bf16.mxu0 0
    %317 = vmatpush1.bf16.xpose.msra.mxu0 0
    %318 = vmatprep.subr.bf16.mxu0 0
    %319 = vmatpush1.bf16.xpose.msra.mxu0 0
    %320 = vmatprep.subr.bf16.mxu0 0
    %321 = vmatpush1.bf16.xpose.msra.mxu0 %v304
    %322 = vmatprep.subr.bf16.mxu0 0
    %323 = vmatpush2.bf16.xpose.msra.mxu0 0
    %324 = vmatprep.subr.bf16.mxu0 0
    %325 = vmatpush2.bf16.xpose.msra.mxu0 0
    %326 = vmatprep.subr.bf16.mxu0 0
    %327 = vmatpush2.bf16.xpose.msra.mxu0 0
    %328 = vmatprep.subr.bf16.mxu0 0
    %329 = vmatpush2.bf16.xpose.msra.mxu0 0
    %330 = vmatprep.subr.bf16.mxu0 0
    %331 = vmatpush2.bf16.xpose.msra.mxu0 0
    %332 = vmatprep.subr.bf16.mxu0 0
    %333 = vmatpush2.bf16.xpose.msra.mxu0 0
    %334 = vmatprep.subr.bf16.mxu0 0
    %335 = vmatpush2.bf16.xpose.msra.mxu0 0
    %336 = vmatprep.subr.bf16.mxu0 0
    %337 = vmatpush2.bf16.xpose.msra.mxu0 0
    %338 = vmatprep.mubr.bf16.mxu0 0
    %339 = vmatmul.mubr.bf16.gmra.mxu0 %v301
    %v340 = vpop.f32.mrf.mxu0
    %v341 = vadd.f32 0.0, %v340
    %v342 = vpop.f32.mrf.mxu0
    %v343 = vpop.f32.mrf.mxu0
    %v344 = vpop.f32.mrf.mxu0
    %345 = vdwg.mxu0
    %346 = vrot.lane.b32.xlu0 %v146, 96
    %v347 = vpop.permute.xlu0 %346
    %v349 = vsel %vm155, %v132, 0
    %v352 = vsel %vm155, %v347, 0
    %354 = vmatprep.subr.bf16.mxu0 0
    %355 = vmatpush1.bf16.xpose.msra.mxu0 0
    %356 = vmatprep.subr.bf16.mxu0 0
    %357 = vmatpush1.bf16.xpose.msra.mxu0 0
    %358 = vmatprep.subr.bf16.mxu0 0
    %359 = vmatpush1.bf16.xpose.msra.mxu0 0
    %360 = vmatprep.subr.bf16.mxu0 0
    %361 = vmatpush1.bf16.xpose.msra.mxu0 0
    %362 = vmatprep.subr.bf16.mxu0 0
    %363 = vmatpush1.bf16.xpose.msra.mxu0 0
    %364 = vmatprep.subr.bf16.mxu0 0
    %365 = vmatpush1.bf16.xpose.msra.mxu0 0
    %366 = vmatprep.subr.bf16.mxu0 0
    %367 = vmatpush1.bf16.xpose.msra.mxu0 0
    %368 = vmatprep.subr.bf16.mxu0 0
    %369 = vmatpush1.bf16.xpose.msra.mxu0 %v352
    %370 = vmatprep.subr.bf16.mxu0 0
    %371 = vmatpush2.bf16.xpose.msra.mxu0 0
    %372 = vmatprep.subr.bf16.mxu0 0
    %373 = vmatpush2.bf16.xpose.msra.mxu0 0
    %374 = vmatprep.subr.bf16.mxu0 0
    %375 = vmatpush2.bf16.xpose.msra.mxu0 0
    %376 = vmatprep.subr.bf16.mxu0 0
    %377 = vmatpush2.bf16.xpose.msra.mxu0 0
    %378 = vmatprep.subr.bf16.mxu0 0
    %379 = vmatpush2.bf16.xpose.msra.mxu0 0
    %380 = vmatprep.subr.bf16.mxu0 0
    %381 = vmatpush2.bf16.xpose.msra.mxu0 0
    %382 = vmatprep.subr.bf16.mxu0 0
    %383 = vmatpush2.bf16.xpose.msra.mxu0 0
    %384 = vmatprep.subr.bf16.mxu0 0
    %385 = vmatpush2.bf16.xpose.msra.mxu0 0
    %386 = vmatprep.mubr.bf16.mxu0 0
    %387 = vmatmul.mubr.bf16.gmra.mxu0 %v349
    %v388 = vpop.f32.mrf.mxu0
    %v389 = vadd.f32 0.0, %v388
    %v390 = vpop.f32.mrf.mxu0
    %v391 = vpop.f32.mrf.mxu0
    %v392 = vpop.f32.mrf.mxu0
    %393 = vdwg.mxu0
    %394 = vrot.lane.b32.xlu0 %v148, 96
    %v395 = vpop.permute.xlu0 %394
    %v397 = vsel %vm155, %v134, 0
    %v400 = vsel %vm155, %v395, 0
    %402 = vmatprep.subr.bf16.mxu0 0
    %403 = vmatpush1.bf16.xpose.msra.mxu0 0
    %404 = vmatprep.subr.bf16.mxu0 0
    %405 = vmatpush1.bf16.xpose.msra.mxu0 0
    %406 = vmatprep.subr.bf16.mxu0 0
    %407 = vmatpush1.bf16.xpose.msra.mxu0 0
    %408 = vmatprep.subr.bf16.mxu0 0
    %409 = vmatpush1.bf16.xpose.msra.mxu0 0
    %410 = vmatprep.subr.bf16.mxu0 0
    %411 = vmatpush1.bf16.xpose.msra.mxu0 0
    %412 = vmatprep.subr.bf16.mxu0 0
    %413 = vmatpush1.bf16.xpose.msra.mxu0 0
    %414 = vmatprep.subr.bf16.mxu0 0
    %415 = vmatpush1.bf16.xpose.msra.mxu0 0
    %416 = vmatprep.subr.bf16.mxu0 0
    %417 = vmatpush1.bf16.xpose.msra.mxu0 %v400
    %418 = vmatprep.subr.bf16.mxu0 0
    %419 = vmatpush2.bf16.xpose.msra.mxu0 0
    %420 = vmatprep.subr.bf16.mxu0 0
    %421 = vmatpush2.bf16.xpose.msra.mxu0 0
    %422 = vmatprep.subr.bf16.mxu0 0
    %423 = vmatpush2.bf16.xpose.msra.mxu0 0
    %424 = vmatprep.subr.bf16.mxu0 0
    %425 = vmatpush2.bf16.xpose.msra.mxu0 0
    %426 = vmatprep.subr.bf16.mxu0 0
    %427 = vmatpush2.bf16.xpose.msra.mxu0 0
    %428 = vmatprep.subr.bf16.mxu0 0
    %429 = vmatpush2.bf16.xpose.msra.mxu0 0
    %430 = vmatprep.subr.bf16.mxu0 0
    %431 = vmatpush2.bf16.xpose.msra.mxu0 0
    %432 = vmatprep.subr.bf16.mxu0 0
    %433 = vmatpush2.bf16.xpose.msra.mxu0 0
    %434 = vmatprep.mubr.bf16.mxu0 0
    %435 = vmatmul.mubr.bf16.gmra.mxu0 %v397
    %v436 = vpop.f32.mrf.mxu0
    %v437 = vadd.f32 0.0, %v436
    %v438 = vpop.f32.mrf.mxu0
    %v439 = vpop.f32.mrf.mxu0
    %v440 = vpop.f32.mrf.mxu0
    %441 = vdwg.mxu0
    %442 = vrot.lane.b32.xlu0 %v150, 96
    %v443 = vpop.permute.xlu0 %442
    %v445 = vsel %vm155, %v136, 0
    %v448 = vsel %vm155, %v443, 0
    %450 = vmatprep.subr.bf16.mxu0 0
    %451 = vmatpush1.bf16.xpose.msra.mxu0 0
    %452 = vmatprep.subr.bf16.mxu0 0
    %453 = vmatpush1.bf16.xpose.msra.mxu0 0
    %454 = vmatprep.subr.bf16.mxu0 0
    %455 = vmatpush1.bf16.xpose.msra.mxu0 0
    %456 = vmatprep.subr.bf16.mxu0 0
    %457 = vmatpush1.bf16.xpose.msra.mxu0 0
    %458 = vmatprep.subr.bf16.mxu0 0
    %459 = vmatpush1.bf16.xpose.msra.mxu0 0
    %460 = vmatprep.subr.bf16.mxu0 0
    %461 = vmatpush1.bf16.xpose.msra.mxu0 0
    %462 = vmatprep.subr.bf16.mxu0 0
    %463 = vmatpush1.bf16.xpose.msra.mxu0 0
    %464 = vmatprep.subr.bf16.mxu0 0
    %465 = vmatpush1.bf16.xpose.msra.mxu0 %v448
    %466 = vmatprep.subr.bf16.mxu0 0
    %467 = vmatpush2.bf16.xpose.msra.mxu0 0
    %468 = vmatprep.subr.bf16.mxu0 0
    %469 = vmatpush2.bf16.xpose.msra.mxu0 0
    %470 = vmatprep.subr.bf16.mxu0 0
    %471 = vmatpush2.bf16.xpose.msra.mxu0 0
    %472 = vmatprep.subr.bf16.mxu0 0
    %473 = vmatpush2.bf16.xpose.msra.mxu0 0
    %474 = vmatprep.subr.bf16.mxu0 0
    %475 = vmatpush2.bf16.xpose.msra.mxu0 0
    %476 = vmatprep.subr.bf16.mxu0 0
    %477 = vmatpush2.bf16.xpose.msra.mxu0 0
    %478 = vmatprep.subr.bf16.mxu0 0
    %479 = vmatpush2.bf16.xpose.msra.mxu0 0
    %480 = vmatprep.subr.bf16.mxu0 0
    %481 = vmatpush2.bf16.xpose.msra.mxu0 0
    %482 = vmatprep.mubr.bf16.mxu0 0
    %483 = vmatmul.mubr.bf16.gmra.mxu0 %v445
    %v484 = vpop.f32.mrf.mxu0
    %v485 = vadd.f32 0.0, %v484
    %v486 = vpop.f32.mrf.mxu0
    %v487 = vpop.f32.mrf.mxu0
    %v488 = vpop.f32.mrf.mxu0
    %489 = vdwg.mxu0
    %490 = vrot.lane.b32.xlu0 %v152, 96
    %v491 = vpop.permute.xlu0 %490
    %v493 = vsel %vm155, %v138, 0
    %v496 = vsel %vm155, %v491, 0
    %498 = vmatprep.subr.bf16.mxu0 0
    %499 = vmatpush1.bf16.xpose.msra.mxu0 0
    %500 = vmatprep.subr.bf16.mxu0 0
    %501 = vmatpush1.bf16.xpose.msra.mxu0 0
    %502 = vmatprep.subr.bf16.mxu0 0
    %503 = vmatpush1.bf16.xpose.msra.mxu0 0
    %504 = vmatprep.subr.bf16.mxu0 0
    %505 = vmatpush1.bf16.xpose.msra.mxu0 0
    %506 = vmatprep.subr.bf16.mxu0 0
    %507 = vmatpush1.bf16.xpose.msra.mxu0 0
    %508 = vmatprep.subr.bf16.mxu0 0
    %509 = vmatpush1.bf16.xpose.msra.mxu0 0
    %510 = vmatprep.subr.bf16.mxu0 0
    %511 = vmatpush1.bf16.xpose.msra.mxu0 0
    %512 = vmatprep.subr.bf16.mxu0 0
    %513 = vmatpush1.bf16.xpose.msra.mxu0 %v496
    %514 = vmatprep.subr.bf16.mxu0 0
    %515 = vmatpush2.bf16.xpose.msra.mxu0 0
    %516 = vmatprep.subr.bf16.mxu0 0
    %517 = vmatpush2.bf16.xpose.msra.mxu0 0
    %518 = vmatprep.subr.bf16.mxu0 0
    %519 = vmatpush2.bf16.xpose.msra.mxu0 0
    %520 = vmatprep.subr.bf16.mxu0 0
    %521 = vmatpush2.bf16.xpose.msra.mxu0 0
    %522 = vmatprep.subr.bf16.mxu0 0
    %523 = vmatpush2.bf16.xpose.msra.mxu0 0
    %524 = vmatprep.subr.bf16.mxu0 0
    %525 = vmatpush2.bf16.xpose.msra.mxu0 0
    %526 = vmatprep.subr.bf16.mxu0 0
    %527 = vmatpush2.bf16.xpose.msra.mxu0 0
    %528 = vmatprep.subr.bf16.mxu0 0
    %529 = vmatpush2.bf16.xpose.msra.mxu0 0
    %530 = vmatprep.mubr.bf16.mxu0 0
    %531 = vmatmul.mubr.bf16.gmra.mxu0 %v493
    %v532 = vpop.f32.mrf.mxu0
    %v533 = vadd.f32 0.0, %v532
    %v534 = vpop.f32.mrf.mxu0
    %v535 = vpop.f32.mrf.mxu0
    %v536 = vpop.f32.mrf.mxu0
    %537 = vdwg.mxu0
    %v538 = vsel %vm155, %v197, -inf
    %539 = vmax.xlane.f32.xlu0 %v538
    %v540 = vpop.xlane.xlu0 %539
    %v541 = vsel %vm155, %v245, -inf
    %542 = vmax.xlane.f32.xlu0 %v541
    %v543 = vpop.xlane.xlu0 %542
    %v544 = vsel %vm155, %v293, -inf
    %545 = vmax.xlane.f32.xlu0 %v544
    %v546 = vpop.xlane.xlu0 %545
    %v547 = vsel %vm155, %v341, -inf
    %548 = vmax.xlane.f32.xlu0 %v547
    %v549 = vpop.xlane.xlu0 %548
    %v550 = vsel %vm155, %v389, -inf
    %551 = vmax.xlane.f32.xlu0 %v550
    %v552 = vpop.xlane.xlu0 %551
    %v553 = vsel %vm155, %v437, -inf
    %554 = vmax.xlane.f32.xlu0 %v553
    %v555 = vpop.xlane.xlu0 %554
    %v556 = vsel %vm155, %v485, -inf
    %557 = vmax.xlane.f32.xlu0 %v556
    %v558 = vpop.xlane.xlu0 %557
    %v559 = vsel %vm155, %v533, -inf
    %560 = vmax.xlane.f32.xlu0 %v559
    %v561 = vpop.xlane.xlu0 %560
    %v562 = vsub.f32 %v197, %v540
    %v563 = vsub.f32 %v245, %v543
    %v564 = vsub.f32 %v293, %v546
    %v565 = vsub.f32 %v341, %v549
    %v566 = vsub.f32 %v389, %v552
    %v567 = vsub.f32 %v437, %v555
    %v568 = vsub.f32 %v485, %v558
    %v569 = vsub.f32 %v533, %v561
    %v570 = vmul.f32 %v562, 1.442695
    %v571 = vpow.pop %v570
    %v572 = vmul.f32 %v563, 1.442695
    %v573 = vpow.pop %v572
    %v574 = vmul.f32 %v564, 1.442695
    %v575 = vpow.pop %v574
    %v576 = vmul.f32 %v565, 1.442695
    %v577 = vpow.pop %v576
    %v578 = vmul.f32 %v566, 1.442695
    %v579 = vpow.pop %v578
    %v580 = vmul.f32 %v567, 1.442695
    %v581 = vpow.pop %v580
    %v582 = vmul.f32 %v568, 1.442695
    %v583 = vpow.pop %v582
    %v584 = vmul.f32 %v569, 1.442695
    %v585 = vpow.pop %v584
    %v586 = vsel %vm155, %v571, 0.0
    %587 = vadd.xlane.f32.xlu0 %v586
    %v588 = vpop.xlane.xlu0 %587
    %v589 = vsel %vm155, %v573, 0.0
    %590 = vadd.xlane.f32.xlu0 %v589
    %v591 = vpop.xlane.xlu0 %590
    %v592 = vsel %vm155, %v575, 0.0
    %593 = vadd.xlane.f32.xlu0 %v592
    %v594 = vpop.xlane.xlu0 %593
    %v595 = vsel %vm155, %v577, 0.0
    %596 = vadd.xlane.f32.xlu0 %v595
    %v597 = vpop.xlane.xlu0 %596
    %v598 = vsel %vm155, %v579, 0.0
    %599 = vadd.xlane.f32.xlu0 %v598
    %v600 = vpop.xlane.xlu0 %599
    %v601 = vsel %vm155, %v581, 0.0
    %602 = vadd.xlane.f32.xlu0 %v601
    %v603 = vpop.xlane.xlu0 %602
    %v604 = vsel %vm155, %v583, 0.0
    %605 = vadd.xlane.f32.xlu0 %v604
    %v606 = vpop.xlane.xlu0 %605
    %v607 = vsel %vm155, %v585, 0.0
    %608 = vadd.xlane.f32.xlu0 %v607
    %v609 = vpop.xlane.xlu0 %608
    %v610 = vpack.c.bf16 %v571, %v571
    %v611 = vpack.c.bf16 %v573, %v573
    %v612 = vpack.c.bf16 %v575, %v575
    %v613 = vpack.c.bf16 %v577, %v577
    %v614 = vpack.c.bf16 %v579, %v579
    %v615 = vpack.c.bf16 %v581, %v581
    %v616 = vpack.c.bf16 %v583, %v583
    %v617 = vpack.c.bf16 %v585, %v585
    %618 = vrot.lane.b32.xlu0 %v124, 64
    %v619 = vpop.permute.xlu0 %618
    %v621 = vsel %vm155, %v610, 0
    %vm623 = vcmask 1043456
    %v625 = vsel %vm623, %v619, 0
    %627 = vmatprep.subr.bf16.mxu0 0
    %628 = vmatpush1.bf16.msra.mxu0 0
    %629 = vmatprep.subr.bf16.mxu0 0
    %630 = vmatpush1.bf16.msra.mxu0 0
    %631 = vmatprep.subr.bf16.mxu0 0
    %632 = vmatpush1.bf16.msra.mxu0 0
    %633 = vmatprep.subr.bf16.mxu0 0
    %634 = vmatpush1.bf16.msra.mxu0 0
    %635 = vmatprep.subr.bf16.mxu0 0
    %636 = vmatpush1.bf16.msra.mxu0 0
    %637 = vmatprep.subr.bf16.mxu0 0
    %638 = vmatpush1.bf16.msra.mxu0 0
    %639 = vmatprep.subr.bf16.mxu0 0
    %640 = vmatpush1.bf16.msra.mxu0 0
    %641 = vmatprep.subr.bf16.mxu0 0
    %642 = vmatpush1.bf16.msra.mxu0 %v625
    %643 = vmatprep.subr.bf16.mxu0 0
    %644 = vmatpush2.bf16.msra.mxu0 0
    %645 = vmatprep.subr.bf16.mxu0 0
    %646 = vmatpush2.bf16.msra.mxu0 0
    %647 = vmatprep.subr.bf16.mxu0 0
    %648 = vmatpush2.bf16.msra.mxu0 0
    %649 = vmatprep.subr.bf16.mxu0 0
    %650 = vmatpush2.bf16.msra.mxu0 0
    %651 = vmatprep.subr.bf16.mxu0 0
    %652 = vmatpush2.bf16.msra.mxu0 0
    %653 = vmatprep.subr.bf16.mxu0 0
    %654 = vmatpush2.bf16.msra.mxu0 0
    %655 = vmatprep.subr.bf16.mxu0 0
    %656 = vmatpush2.bf16.msra.mxu0 0
    %657 = vmatprep.subr.bf16.mxu0 0
    %658 = vmatpush2.bf16.msra.mxu0 0
    %659 = vmatprep.mubr.bf16.mxu0 0
    %660 = vmatmul.mubr.bf16.gmra.mxu0 %v621
    %v661 = vpop.f32.mrf.mxu0
    %v662 = vadd.f32 0.0, %v661
    %v663 = vpop.f32.mrf.mxu0
    %v664 = vpop.f32.mrf.mxu0
    %v665 = vpop.f32.mrf.mxu0
    %666 = vdwg.mxu0
    %667 = vrot.lane.b32.xlu0 %v140, 64
    %v668 = vpop.permute.xlu0 %667
    %v670 = vsel %vm155, %v611, 0
    %v673 = vsel %vm623, %v668, 0
    %675 = vmatprep.subr.bf16.mxu0 0
    %676 = vmatpush1.bf16.msra.mxu0 0
    %677 = vmatprep.subr.bf16.mxu0 0
    %678 = vmatpush1.bf16.msra.mxu0 0
    %679 = vmatprep.subr.bf16.mxu0 0
    %680 = vmatpush1.bf16.msra.mxu0 0
    %681 = vmatprep.subr.bf16.mxu0 0
    %682 = vmatpush1.bf16.msra.mxu0 0
    %683 = vmatprep.subr.bf16.mxu0 0
    %684 = vmatpush1.bf16.msra.mxu0 0
    %685 = vmatprep.subr.bf16.mxu0 0
    %686 = vmatpush1.bf16.msra.mxu0 0
    %687 = vmatprep.subr.bf16.mxu0 0
    %688 = vmatpush1.bf16.msra.mxu0 0
    %689 = vmatprep.subr.bf16.mxu0 0
    %690 = vmatpush1.bf16.msra.mxu0 %v673
    %691 = vmatprep.subr.bf16.mxu0 0
    %692 = vmatpush2.bf16.msra.mxu0 0
    %693 = vmatprep.subr.bf16.mxu0 0
    %694 = vmatpush2.bf16.msra.mxu0 0
    %695 = vmatprep.subr.bf16.mxu0 0
    %696 = vmatpush2.bf16.msra.mxu0 0
    %697 = vmatprep.subr.bf16.mxu0 0
    %698 = vmatpush2.bf16.msra.mxu0 0
    %699 = vmatprep.subr.bf16.mxu0 0
    %700 = vmatpush2.bf16.msra.mxu0 0
    %701 = vmatprep.subr.bf16.mxu0 0
    %702 = vmatpush2.bf16.msra.mxu0 0
    %703 = vmatprep.subr.bf16.mxu0 0
    %704 = vmatpush2.bf16.msra.mxu0 0
    %705 = vmatprep.subr.bf16.mxu0 0
    %706 = vmatpush2.bf16.msra.mxu0 0
    %707 = vmatprep.mubr.bf16.mxu0 0
    %708 = vmatmul.mubr.bf16.gmra.mxu0 %v670
    %v709 = vpop.f32.mrf.mxu0
    %v710 = vadd.f32 0.0, %v709
    %v711 = vpop.f32.mrf.mxu0
    %v712 = vpop.f32.mrf.mxu0
    %v713 = vpop.f32.mrf.mxu0
    %714 = vdwg.mxu0
    %715 = vrot.lane.b32.xlu0 %v142, 64
    %v716 = vpop.permute.xlu0 %715
    %v718 = vsel %vm155, %v612, 0
    %v721 = vsel %vm623, %v716, 0
    %723 = vmatprep.subr.bf16.mxu0 0
    %724 = vmatpush1.bf16.msra.mxu0 0
    %725 = vmatprep.subr.bf16.mxu0 0
    %726 = vmatpush1.bf16.msra.mxu0 0
    %727 = vmatprep.subr.bf16.mxu0 0
    %728 = vmatpush1.bf16.msra.mxu0 0
    %729 = vmatprep.subr.bf16.mxu0 0
    %730 = vmatpush1.bf16.msra.mxu0 0
    %731 = vmatprep.subr.bf16.mxu0 0
    %732 = vmatpush1.bf16.msra.mxu0 0
    %733 = vmatprep.subr.bf16.mxu0 0
    %734 = vmatpush1.bf16.msra.mxu0 0
    %735 = vmatprep.subr.bf16.mxu0 0
    %736 = vmatpush1.bf16.msra.mxu0 0
    %737 = vmatprep.subr.bf16.mxu0 0
    %738 = vmatpush1.bf16.msra.mxu0 %v721
    %739 = vmatprep.subr.bf16.mxu0 0
    %740 = vmatpush2.bf16.msra.mxu0 0
    %741 = vmatprep.subr.bf16.mxu0 0
    %742 = vmatpush2.bf16.msra.mxu0 0
    %743 = vmatprep.subr.bf16.mxu0 0
    %744 = vmatpush2.bf16.msra.mxu0 0
    %745 = vmatprep.subr.bf16.mxu0 0
    %746 = vmatpush2.bf16.msra.mxu0 0
    %747 = vmatprep.subr.bf16.mxu0 0
    %748 = vmatpush2.bf16.msra.mxu0 0
    %749 = vmatprep.subr.bf16.mxu0 0
    %750 = vmatpush2.bf16.msra.mxu0 0
    %751 = vmatprep.subr.bf16.mxu0 0
    %752 = vmatpush2.bf16.msra.mxu0 0
    %753 = vmatprep.subr.bf16.mxu0 0
    %754 = vmatpush2.bf16.msra.mxu0 0
    %755 = vmatprep.mubr.bf16.mxu0 0
    %756 = vmatmul.mubr.bf16.gmra.mxu0 %v718
    %v757 = vpop.f32.mrf.mxu0
    %v758 = vadd.f32 0.0, %v757
    %v759 = vpop.f32.mrf.mxu0
    %v760 = vpop.f32.mrf.mxu0
    %v761 = vpop.f32.mrf.mxu0
    %762 = vdwg.mxu0
    %763 = vrot.lane.b32.xlu0 %v144, 64
    %v764 = vpop.permute.xlu0 %763
    %v766 = vsel %vm155, %v613, 0
    %v769 = vsel %vm623, %v764, 0
    %771 = vmatprep.subr.bf16.mxu0 0
    %772 = vmatpush1.bf16.msra.mxu0 0
    %773 = vmatprep.subr.bf16.mxu0 0
    %774 = vmatpush1.bf16.msra.mxu0 0
    %775 = vmatprep.subr.bf16.mxu0 0
    %776 = vmatpush1.bf16.msra.mxu0 0
    %777 = vmatprep.subr.bf16.mxu0 0
    %778 = vmatpush1.bf16.msra.mxu0 0
    %779 = vmatprep.subr.bf16.mxu0 0
    %780 = vmatpush1.bf16.msra.mxu0 0
    %781 = vmatprep.subr.bf16.mxu0 0
    %782 = vmatpush1.bf16.msra.mxu0 0
    %783 = vmatprep.subr.bf16.mxu0 0
    %784 = vmatpush1.bf16.msra.mxu0 0
    %785 = vmatprep.subr.bf16.mxu0 0
    %786 = vmatpush1.bf16.msra.mxu0 %v769
    %787 = vmatprep.subr.bf16.mxu0 0
    %788 = vmatpush2.bf16.msra.mxu0 0
    %789 = vmatprep.subr.bf16.mxu0 0
    %790 = vmatpush2.bf16.msra.mxu0 0
    %791 = vmatprep.subr.bf16.mxu0 0
    %792 = vmatpush2.bf16.msra.mxu0 0
    %793 = vmatprep.subr.bf16.mxu0 0
    %794 = vmatpush2.bf16.msra.mxu0 0
    %795 = vmatprep.subr.bf16.mxu0 0
    %796 = vmatpush2.bf16.msra.mxu0 0
    %797 = vmatprep.subr.bf16.mxu0 0
    %798 = vmatpush2.bf16.msra.mxu0 0
    %799 = vmatprep.subr.bf16.mxu0 0
    %800 = vmatpush2.bf16.msra.mxu0 0
    %801 = vmatprep.subr.bf16.mxu0 0
    %802 = vmatpush2.bf16.msra.mxu0 0
    %803 = vmatprep.mubr.bf16.mxu0 0
    %804 = vmatmul.mubr.bf16.gmra.mxu0 %v766
    %v805 = vpop.f32.mrf.mxu0
    %v806 = vadd.f32 0.0, %v805
    %v807 = vpop.f32.mrf.mxu0
    %v808 = vpop.f32.mrf.mxu0
    %v809 = vpop.f32.mrf.mxu0
    %810 = vdwg.mxu0
    %811 = vrot.lane.b32.xlu0 %v146, 64
    %v812 = vpop.permute.xlu0 %811
    %v814 = vsel %vm155, %v614, 0
    %v817 = vsel %vm623, %v812, 0
    %819 = vmatprep.subr.bf16.mxu0 0
    %820 = vmatpush1.bf16.msra.mxu0 0
    %821 = vmatprep.subr.bf16.mxu0 0
    %822 = vmatpush1.bf16.msra.mxu0 0
    %823 = vmatprep.subr.bf16.mxu0 0
    %824 = vmatpush1.bf16.msra.mxu0 0
    %825 = vmatprep.subr.bf16.mxu0 0
    %826 = vmatpush1.bf16.msra.mxu0 0
    %827 = vmatprep.subr.bf16.mxu0 0
    %828 = vmatpush1.bf16.msra.mxu0 0
    %829 = vmatprep.subr.bf16.mxu0 0
    %830 = vmatpush1.bf16.msra.mxu0 0
    %831 = vmatprep.subr.bf16.mxu0 0
    %832 = vmatpush1.bf16.msra.mxu0 0
    %833 = vmatprep.subr.bf16.mxu0 0
    %834 = vmatpush1.bf16.msra.mxu0 %v817
    %835 = vmatprep.subr.bf16.mxu0 0
    %836 = vmatpush2.bf16.msra.mxu0 0
    %837 = vmatprep.subr.bf16.mxu0 0
    %838 = vmatpush2.bf16.msra.mxu0 0
    %839 = vmatprep.subr.bf16.mxu0 0
    %840 = vmatpush2.bf16.msra.mxu0 0
    %841 = vmatprep.subr.bf16.mxu0 0
    %842 = vmatpush2.bf16.msra.mxu0 0
    %843 = vmatprep.subr.bf16.mxu0 0
    %844 = vmatpush2.bf16.msra.mxu0 0
    %845 = vmatprep.subr.bf16.mxu0 0
    %846 = vmatpush2.bf16.msra.mxu0 0
    %847 = vmatprep.subr.bf16.mxu0 0
    %848 = vmatpush2.bf16.msra.mxu0 0
    %849 = vmatprep.subr.bf16.mxu0 0
    %850 = vmatpush2.bf16.msra.mxu0 0
    %851 = vmatprep.mubr.bf16.mxu0 0
    %852 = vmatmul.mubr.bf16.gmra.mxu0 %v814
    %v853 = vpop.f32.mrf.mxu0
    %v854 = vadd.f32 0.0, %v853
    %v855 = vpop.f32.mrf.mxu0
    %v856 = vpop.f32.mrf.mxu0
    %v857 = vpop.f32.mrf.mxu0
    %858 = vdwg.mxu0
    %859 = vrot.lane.b32.xlu0 %v148, 64
    %v860 = vpop.permute.xlu0 %859
    %v862 = vsel %vm155, %v615, 0
    %v865 = vsel %vm623, %v860, 0
    %867 = vmatprep.subr.bf16.mxu0 0
    %868 = vmatpush1.bf16.msra.mxu0 0
    %869 = vmatprep.subr.bf16.mxu0 0
    %870 = vmatpush1.bf16.msra.mxu0 0
    %871 = vmatprep.subr.bf16.mxu0 0
    %872 = vmatpush1.bf16.msra.mxu0 0
    %873 = vmatprep.subr.bf16.mxu0 0
    %874 = vmatpush1.bf16.msra.mxu0 0
    %875 = vmatprep.subr.bf16.mxu0 0
    %876 = vmatpush1.bf16.msra.mxu0 0
    %877 = vmatprep.subr.bf16.mxu0 0
    %878 = vmatpush1.bf16.msra.mxu0 0
    %879 = vmatprep.subr.bf16.mxu0 0
    %880 = vmatpush1.bf16.msra.mxu0 0
    %881 = vmatprep.subr.bf16.mxu0 0
    %882 = vmatpush1.bf16.msra.mxu0 %v865
    %883 = vmatprep.subr.bf16.mxu0 0
    %884 = vmatpush2.bf16.msra.mxu0 0
    %885 = vmatprep.subr.bf16.mxu0 0
    %886 = vmatpush2.bf16.msra.mxu0 0
    %887 = vmatprep.subr.bf16.mxu0 0
    %888 = vmatpush2.bf16.msra.mxu0 0
    %889 = vmatprep.subr.bf16.mxu0 0
    %890 = vmatpush2.bf16.msra.mxu0 0
    %891 = vmatprep.subr.bf16.mxu0 0
    %892 = vmatpush2.bf16.msra.mxu0 0
    %893 = vmatprep.subr.bf16.mxu0 0
    %894 = vmatpush2.bf16.msra.mxu0 0
    %895 = vmatprep.subr.bf16.mxu0 0
    %896 = vmatpush2.bf16.msra.mxu0 0
    %897 = vmatprep.subr.bf16.mxu0 0
    %898 = vmatpush2.bf16.msra.mxu0 0
    %899 = vmatprep.mubr.bf16.mxu0 0
    %900 = vmatmul.mubr.bf16.gmra.mxu0 %v862
    %v901 = vpop.f32.mrf.mxu0
    %v902 = vadd.f32 0.0, %v901
    %v903 = vpop.f32.mrf.mxu0
    %v904 = vpop.f32.mrf.mxu0
    %v905 = vpop.f32.mrf.mxu0
    %906 = vdwg.mxu0
    %907 = vrot.lane.b32.xlu0 %v150, 64
    %v908 = vpop.permute.xlu0 %907
    %v910 = vsel %vm155, %v616, 0
    %v913 = vsel %vm623, %v908, 0
    %915 = vmatprep.subr.bf16.mxu0 0
    %916 = vmatpush1.bf16.msra.mxu0 0
    %917 = vmatprep.subr.bf16.mxu0 0
    %918 = vmatpush1.bf16.msra.mxu0 0
    %919 = vmatprep.subr.bf16.mxu0 0
    %920 = vmatpush1.bf16.msra.mxu0 0
    %921 = vmatprep.subr.bf16.mxu0 0
    %922 = vmatpush1.bf16.msra.mxu0 0
    %923 = vmatprep.subr.bf16.mxu0 0
    %924 = vmatpush1.bf16.msra.mxu0 0
    %925 = vmatprep.subr.bf16.mxu0 0
    %926 = vmatpush1.bf16.msra.mxu0 0
    %927 = vmatprep.subr.bf16.mxu0 0
    %928 = vmatpush1.bf16.msra.mxu0 0
    %929 = vmatprep.subr.bf16.mxu0 0
    %930 = vmatpush1.bf16.msra.mxu0 %v913
    %931 = vmatprep.subr.bf16.mxu0 0
    %932 = vmatpush2.bf16.msra.mxu0 0
    %933 = vmatprep.subr.bf16.mxu0 0
    %934 = vmatpush2.bf16.msra.mxu0 0
    %935 = vmatprep.subr.bf16.mxu0 0
    %936 = vmatpush2.bf16.msra.mxu0 0
    %937 = vmatprep.subr.bf16.mxu0 0
    %938 = vmatpush2.bf16.msra.mxu0 0
    %939 = vmatprep.subr.bf16.mxu0 0
    %940 = vmatpush2.bf16.msra.mxu0 0
    %941 = vmatprep.subr.bf16.mxu0 0
    %942 = vmatpush2.bf16.msra.mxu0 0
    %943 = vmatprep.subr.bf16.mxu0 0
    %944 = vmatpush2.bf16.msra.mxu0 0
    %945 = vmatprep.subr.bf16.mxu0 0
    %946 = vmatpush2.bf16.msra.mxu0 0
    %947 = vmatprep.mubr.bf16.mxu0 0
    %948 = vmatmul.mubr.bf16.gmra.mxu0 %v910
    %v949 = vpop.f32.mrf.mxu0
    %v950 = vadd.f32 0.0, %v949
    %v951 = vpop.f32.mrf.mxu0
    %v952 = vpop.f32.mrf.mxu0
    %v953 = vpop.f32.mrf.mxu0
    %954 = vdwg.mxu0
    %955 = vrot.lane.b32.xlu0 %v152, 64
    %v956 = vpop.permute.xlu0 %955
    %v958 = vsel %vm155, %v617, 0
    %v961 = vsel %vm623, %v956, 0
    %963 = vmatprep.subr.bf16.mxu0 0
    %964 = vmatpush1.bf16.msra.mxu0 0
    %965 = vmatprep.subr.bf16.mxu0 0
    %966 = vmatpush1.bf16.msra.mxu0 0
    %967 = vmatprep.subr.bf16.mxu0 0
    %968 = vmatpush1.bf16.msra.mxu0 0
    %969 = vmatprep.subr.bf16.mxu0 0
    %970 = vmatpush1.bf16.msra.mxu0 0
    %971 = vmatprep.subr.bf16.mxu0 0
    %972 = vmatpush1.bf16.msra.mxu0 0
    %973 = vmatprep.subr.bf16.mxu0 0
    %974 = vmatpush1.bf16.msra.mxu0 0
    %975 = vmatprep.subr.bf16.mxu0 0
    %976 = vmatpush1.bf16.msra.mxu0 0
    %977 = vmatprep.subr.bf16.mxu0 0
    %978 = vmatpush1.bf16.msra.mxu0 %v961
    %979 = vmatprep.subr.bf16.mxu0 0
    %980 = vmatpush2.bf16.msra.mxu0 0
    %981 = vmatprep.subr.bf16.mxu0 0
    %982 = vmatpush2.bf16.msra.mxu0 0
    %983 = vmatprep.subr.bf16.mxu0 0
    %984 = vmatpush2.bf16.msra.mxu0 0
    %985 = vmatprep.subr.bf16.mxu0 0
    %986 = vmatpush2.bf16.msra.mxu0 0
    %987 = vmatprep.subr.bf16.mxu0 0
    %988 = vmatpush2.bf16.msra.mxu0 0
    %989 = vmatprep.subr.bf16.mxu0 0
    %990 = vmatpush2.bf16.msra.mxu0 0
    %991 = vmatprep.subr.bf16.mxu0 0
    %992 = vmatpush2.bf16.msra.mxu0 0
    %993 = vmatprep.subr.bf16.mxu0 0
    %994 = vmatpush2.bf16.msra.mxu0 0
    %995 = vmatprep.mubr.bf16.mxu0 0
    %996 = vmatmul.mubr.bf16.gmra.mxu0 %v958
    %v997 = vpop.f32.mrf.mxu0
    %v998 = vadd.f32 0.0, %v997
    %v999 = vpop.f32.mrf.mxu0
    %v1000 = vpop.f32.mrf.mxu0
    %v1001 = vpop.f32.mrf.mxu0
    %1002 = vdwg.mxu0
    %v1003 = vrcp.pop %v588
    %v1004 = vrcp.pop %v591
    %v1005 = vrcp.pop %v594
    %v1006 = vrcp.pop %v597
    %v1007 = vrcp.pop %v600
    %v1008 = vrcp.pop %v603
    %v1009 = vrcp.pop %v606
    %v1010 = vrcp.pop %v609
    %v1011 = vmul.f32 %v662, %v1003
    %v1012 = vmul.f32 %v710, %v1004
    %v1013 = vmul.f32 %v758, %v1005
    %v1014 = vmul.f32 %v806, %v1006
    %v1015 = vmul.f32 %v854, %v1007
    %v1016 = vmul.f32 %v902, %v1008
    %v1017 = vmul.f32 %v950, %v1009
    %v1018 = vmul.f32 %v998, %v1010
    %v1019 = vpack.c.bf16 %v1012, %v1011
    %v1020 = vpack.c.bf16 %v1014, %v1013
    %v1021 = vpack.c.bf16 %v1016, %v1015
    %v1022 = vpack.c.bf16 %v1018, %v1017
    %v1023 = vld [vmem:[#allocation7] sm:$0xf]
    %v1024 = vld [vmem:[#allocation7 + $0x4] sm:$0xf]
    %v1025 = vld [vmem:[#allocation7 + $0x8] sm:$0xf]
    %v1026 = vld [vmem:[#allocation7 + $0xc] sm:$0xf]
    %v1028 = vsel %vm155, %v1019, 0
    %v1031 = vsel %vm623, %v1023, 0
    %1033 = vmatprep.subr.bf16.mxu0 0
    %1034 = vmatpush1.bf16.msra.mxu0 0
    %1035 = vmatprep.subr.bf16.mxu0 0
    %1036 = vmatpush1.bf16.msra.mxu0 0
    %1037 = vmatprep.subr.bf16.mxu0 0
    %1038 = vmatpush1.bf16.msra.mxu0 0
    %1039 = vmatprep.subr.bf16.mxu0 0
    %1040 = vmatpush1.bf16.msra.mxu0 0
    %1041 = vmatprep.subr.bf16.mxu0 0
    %1042 = vmatpush1.bf16.msra.mxu0 0
    %1043 = vmatprep.subr.bf16.mxu0 0
    %1044 = vmatpush1.bf16.msra.mxu0 0
    %1045 = vmatprep.subr.bf16.mxu0 0
    %1046 = vmatpush1.bf16.msra.mxu0 0
    %1047 = vmatprep.subr.bf16.mxu0 0
    %1048 = vmatpush1.bf16.msra.mxu0 %v1031
    %1049 = vmatprep.subr.bf16.mxu0 0
    %1050 = vmatpush2.bf16.msra.mxu0 0
    %1051 = vmatprep.subr.bf16.mxu0 0
    %1052 = vmatpush2.bf16.msra.mxu0 0
    %1053 = vmatprep.subr.bf16.mxu0 0
    %1054 = vmatpush2.bf16.msra.mxu0 0
    %1055 = vmatprep.subr.bf16.mxu0 0
    %1056 = vmatpush2.bf16.msra.mxu0 0
    %1057 = vmatprep.subr.bf16.mxu0 0
    %1058 = vmatpush2.bf16.msra.mxu0 0
    %1059 = vmatprep.subr.bf16.mxu0 0
    %1060 = vmatpush2.bf16.msra.mxu0 0
    %1061 = vmatprep.subr.bf16.mxu0 0
    %1062 = vmatpush2.bf16.msra.mxu0 0
    %1063 = vmatprep.subr.bf16.mxu0 0
    %1064 = vmatpush2.bf16.msra.mxu0 0
    %1065 = vmatprep.mubr.bf16.mxu0 0
    %1066 = vmatmul.mubr.bf16.gmra.mxu0 %v1028
    %v1067 = vpop.f32.mrf.mxu0
    %v1068 = vadd.f32 0.0, %v1067
    %v1069 = vpop.f32.mrf.mxu0
    %v1070 = vpop.f32.mrf.mxu0
    %v1071 = vadd.f32 0.0, %v1070
    %v1072 = vpop.f32.mrf.mxu0
    %1073 = vdwg.mxu0
    %v1075 = vsel %vm155, %v1020, 0
    %v1078 = vsel %vm623, %v1024, 0
    %1080 = vmatprep.subr.bf16.mxu0 0
    %1081 = vmatpush1.bf16.msra.mxu0 0
    %1082 = vmatprep.subr.bf16.mxu0 0
    %1083 = vmatpush1.bf16.msra.mxu0 0
    %1084 = vmatprep.subr.bf16.mxu0 0
    %1085 = vmatpush1.bf16.msra.mxu0 0
    %1086 = vmatprep.subr.bf16.mxu0 0
    %1087 = vmatpush1.bf16.msra.mxu0 0
    %1088 = vmatprep.subr.bf16.mxu0 0
    %1089 = vmatpush1.bf16.msra.mxu0 0
    %1090 = vmatprep.subr.bf16.mxu0 0
    %1091 = vmatpush1.bf16.msra.mxu0 0
    %1092 = vmatprep.subr.bf16.mxu0 0
    %1093 = vmatpush1.bf16.msra.mxu0 0
    %1094 = vmatprep.subr.bf16.mxu0 0
    %1095 = vmatpush1.bf16.msra.mxu0 %v1078
    %1096 = vmatprep.subr.bf16.mxu0 0
    %1097 = vmatpush2.bf16.msra.mxu0 0
    %1098 = vmatprep.subr.bf16.mxu0 0
    %1099 = vmatpush2.bf16.msra.mxu0 0
    %1100 = vmatprep.subr.bf16.mxu0 0
    %1101 = vmatpush2.bf16.msra.mxu0 0
    %1102 = vmatprep.subr.bf16.mxu0 0
    %1103 = vmatpush2.bf16.msra.mxu0 0
    %1104 = vmatprep.subr.bf16.mxu0 0
    %1105 = vmatpush2.bf16.msra.mxu0 0
    %1106 = vmatprep.subr.bf16.mxu0 0
    %1107 = vmatpush2.bf16.msra.mxu0 0
    %1108 = vmatprep.subr.bf16.mxu0 0
    %1109 = vmatpush2.bf16.msra.mxu0 0
    %1110 = vmatprep.subr.bf16.mxu0 0
    %1111 = vmatpush2.bf16.msra.mxu0 0
    %1112 = vmatprep.mubr.bf16.mxu0 0
    %1113 = vmatmul.mubr.bf16.gmra.mxu0 %v1075
    %v1114 = vpop.f32.mrf.mxu0
    %v1115 = vadd.f32 0.0, %v1114
    %v1116 = vpop.f32.mrf.mxu0
    %v1117 = vpop.f32.mrf.mxu0
    %v1118 = vadd.f32 0.0, %v1117
    %v1119 = vpop.f32.mrf.mxu0
    %1120 = vdwg.mxu0
    %v1122 = vsel %vm155, %v1021, 0
    %v1125 = vsel %vm623, %v1025, 0
    %1127 = vmatprep.subr.bf16.mxu0 0
    %1128 = vmatpush1.bf16.msra.mxu0 0
    %1129 = vmatprep.subr.bf16.mxu0 0
    %1130 = vmatpush1.bf16.msra.mxu0 0
    %1131 = vmatprep.subr.bf16.mxu0 0
    %1132 = vmatpush1.bf16.msra.mxu0 0
    %1133 = vmatprep.subr.bf16.mxu0 0
    %1134 = vmatpush1.bf16.msra.mxu0 0
    %1135 = vmatprep.subr.bf16.mxu0 0
    %1136 = vmatpush1.bf16.msra.mxu0 0
    %1137 = vmatprep.subr.bf16.mxu0 0
    %1138 = vmatpush1.bf16.msra.mxu0 0
    %1139 = vmatprep.subr.bf16.mxu0 0
    %1140 = vmatpush1.bf16.msra.mxu0 0
    %1141 = vmatprep.subr.bf16.mxu0 0
    %1142 = vmatpush1.bf16.msra.mxu0 %v1125
    %1143 = vmatprep.subr.bf16.mxu0 0
    %1144 = vmatpush2.bf16.msra.mxu0 0
    %1145 = vmatprep.subr.bf16.mxu0 0
    %1146 = vmatpush2.bf16.msra.mxu0 0
    %1147 = vmatprep.subr.bf16.mxu0 0
    %1148 = vmatpush2.bf16.msra.mxu0 0
    %1149 = vmatprep.subr.bf16.mxu0 0
    %1150 = vmatpush2.bf16.msra.mxu0 0
    %1151 = vmatprep.subr.bf16.mxu0 0
    %1152 = vmatpush2.bf16.msra.mxu0 0
    %1153 = vmatprep.subr.bf16.mxu0 0
    %1154 = vmatpush2.bf16.msra.mxu0 0
    %1155 = vmatprep.subr.bf16.mxu0 0
    %1156 = vmatpush2.bf16.msra.mxu0 0
    %1157 = vmatprep.subr.bf16.mxu0 0
    %1158 = vmatpush2.bf16.msra.mxu0 0
    %1159 = vmatprep.mubr.bf16.mxu0 0
    %1160 = vmatmul.mubr.bf16.gmra.mxu0 %v1122
    %v1161 = vpop.f32.mrf.mxu0
    %v1162 = vadd.f32 0.0, %v1161
    %v1163 = vpop.f32.mrf.mxu0
    %v1164 = vpop.f32.mrf.mxu0
    %v1165 = vadd.f32 0.0, %v1164
    %v1166 = vpop.f32.mrf.mxu0
    %1167 = vdwg.mxu0
    %v1169 = vsel %vm155, %v1022, 0
    %v1172 = vsel %vm623, %v1026, 0
    %1174 = vmatprep.subr.bf16.mxu0 0
    %1175 = vmatpush1.bf16.msra.mxu0 0
    %1176 = vmatprep.subr.bf16.mxu0 0
    %1177 = vmatpush1.bf16.msra.mxu0 0
    %1178 = vmatprep.subr.bf16.mxu0 0
    %1179 = vmatpush1.bf16.msra.mxu0 0
    %1180 = vmatprep.subr.bf16.mxu0 0
    %1181 = vmatpush1.bf16.msra.mxu0 0
    %1182 = vmatprep.subr.bf16.mxu0 0
    %1183 = vmatpush1.bf16.msra.mxu0 0
    %1184 = vmatprep.subr.bf16.mxu0 0
    %1185 = vmatpush1.bf16.msra.mxu0 0
    %1186 = vmatprep.subr.bf16.mxu0 0
    %1187 = vmatpush1.bf16.msra.mxu0 0
    %1188 = vmatprep.subr.bf16.mxu0 0
    %1189 = vmatpush1.bf16.msra.mxu0 %v1172
    %1190 = vmatprep.subr.bf16.mxu0 0
    %1191 = vmatpush2.bf16.msra.mxu0 0
    %1192 = vmatprep.subr.bf16.mxu0 0
    %1193 = vmatpush2.bf16.msra.mxu0 0
    %1194 = vmatprep.subr.bf16.mxu0 0
    %1195 = vmatpush2.bf16.msra.mxu0 0
    %1196 = vmatprep.subr.bf16.mxu0 0
    %1197 = vmatpush2.bf16.msra.mxu0 0
    %1198 = vmatprep.subr.bf16.mxu0 0
    %1199 = vmatpush2.bf16.msra.mxu0 0
    %1200 = vmatprep.subr.bf16.mxu0 0
    %1201 = vmatpush2.bf16.msra.mxu0 0
    %1202 = vmatprep.subr.bf16.mxu0 0
    %1203 = vmatpush2.bf16.msra.mxu0 0
    %1204 = vmatprep.subr.bf16.mxu0 0
    %1205 = vmatpush2.bf16.msra.mxu0 0
    %1206 = vmatprep.mubr.bf16.mxu0 0
    %1207 = vmatmul.mubr.bf16.gmra.mxu0 %v1169
    %v1208 = vpop.f32.mrf.mxu0
    %v1209 = vadd.f32 0.0, %v1208
    %v1210 = vpop.f32.mrf.mxu0
    %v1211 = vpop.f32.mrf.mxu0
    %v1212 = vadd.f32 0.0, %v1211
    %v1213 = vpop.f32.mrf.mxu0
    %1214 = vdwg.mxu0
    %v1215 = vadd.f32 %v1068, %v1115
    %v1216 = vadd.f32 %v1215, %v1162
    %v1217 = vadd.f32 %v1216, %v1209
    %v1218 = vadd.f32 %v1071, %v1118
    %v1219 = vadd.f32 %v1218, %v1165
    %v1220 = vadd.f32 %v1219, %v1212
    %1221 = vst [vmem:[#allocation8] sm:$0xff] %v1217
    %1222 = vst [vmem:[#allocation8 + $0x8] sm:$0xff] %v1220
    // Predicated region
    $region26: #{tpu_custom_call.1} parent=1 // pred_check
      _
    $region27: #{tpu_custom_call.1} parent=1 // pred_check_branch
      %1224 = sbr.rel (0) target = $region29
    $region28: #{tpu_custom_call.1} parent=1 // pred_region
      %s1226 = ssub.s32 256, 256
      %1227 = vsyncadd [#allocation4], %s1226
      %s1228 = sshll.u32 [#allocation8], 4
      %s1229 = int_to_ptr.vmem [resolvable:$true] %s1228
      %1234 = dma.vmem_to_hbm [thread:$0]  %s1229, 256, %s3, [#allocation4], 128, 128, 8
    $region29: #{tpu_custom_call.1} parent=1 // pred_fallthru
      _
    // Predicated region
    $region30: #{tpu_custom_call.1} parent=1 // pred_check
      _
    $region31: #{tpu_custom_call.1} parent=1 // pred_check_branch
      %1236 = sbr.rel (0) target = $region33
    $region32: #{tpu_custom_call.1} parent=1 // pred_region
      %1237 = dma.done [#allocation4], 256
    $region33: #{tpu_custom_call.1} parent=1 // pred_fallthru
      _
    %1238 = vsyncpa [#allocation3], 1
    %1239 = vsyncpa [#allocation6], 1
    %1240 = vsyncpa [#allocation4], 1

</llo_original>
